<compile_context>
chip_gen: v7x
topology: tpu7x:2x2x1
jax: 0.10.0
libtpu: 0.0.40
codegen_flags: <defaults>
</compile_context>

<pallas_src>
import math
from functools import partial

import jax
import jax.numpy as jnp
from jax import lax
from jax.experimental import pallas as pl
from jax.experimental.pallas import tpu as pltpu

_BN_EPS = 1e-5

# Row-tile target for the fused 1x1-conv matmuls.  At K=N<=64 a 1024-row bf16
# tile (x + w + out, double-buffered) is well under 1 MiB -- far below even
# v7x's 32 MiB scoped / 64 MiB physical VMEM -- and larger tiles amortize the
# ~0.35 us per grid step.
_TM_TARGET = 1024
# Output-row tile for the direct 3x3 conv (bounds the f32 accumulator /
# vreg pressure and gives the v7x megacore many parallel grid steps).
_CONV_ROW_TARGET = 256
# q (and fallback kv) tile target for the non-local attention.
_ATTN_TILE_TARGET = 256
# Use the single-pass (whole kv resident) attention kernel when the estimated
# per-step footprint is below this; otherwise fall back to flash/online.
_ATTN_SINGLE_PASS_BYTES = 24 * 1024 * 1024
_ATTN_VMEM_LIMIT = 48 * 1024 * 1024   # explicit: v5e's scoped default is 16 MiB


def _round_up(x, m):
    return ((x + m - 1) // m) * m


def _pick_tile(total, target):
    """Largest tile <= target that divides `total` (multiple of 8 when < total)."""
    if total <= target:
        return total
    t = (target // 8) * 8
    while t > 8 and total % t != 0:
        t -= 8
    return t if total % t == 0 else total


# ----------------------------------------------------------------------------
# Pallas kernels
# ----------------------------------------------------------------------------

def _mm_kernel(*refs, slope, use_shift, use_res):
    """Row-tiled fused 1x1 conv: y = act(x@w + shift) [+ res].

    BN scale is pre-folded into w on the host, so there is no per-tile VPU
    scale multiply and one fewer input stream.
    """
    x_ref, w_ref = refs[0], refs[1]
    idx = 2
    shift_ref = None
    if use_shift:
        shift_ref = refs[idx]; idx += 1
    res_ref = None
    if use_res:
        res_ref = refs[idx]; idx += 1
    o_ref = refs[idx]

    y = jnp.dot(x_ref[...], w_ref[...], preferred_element_type=jnp.float32)
    if use_shift:
        y = y + shift_ref[...]
    if slope is not None:
        y = jnp.where(y >= 0.0, y, y * slope)
    if use_res:
        y = y + res_ref[...].astype(jnp.float32)
    o_ref[...] = y.astype(o_ref.dtype)


def matmul_1x1(x2d, w2d, *, shift=None, slope=None, residual=None,
               out_dtype=jnp.float32):
    """pallas_call wrapper: rows = N*H*W tiled over a 'parallel' grid axis."""
    M, K = x2d.shape
    N = w2d.shape[1]
    tm = _pick_tile(_round_up(M, 8), _TM_TARGET)
    Mp = _round_up(M, tm)

    xb = x2d.astype(jnp.bfloat16)
    if Mp != M:
        xb = jnp.pad(xb, ((0, Mp - M), (0, 0)))

    args = [xb, w2d.astype(jnp.bfloat16)]
    in_specs = [pl.BlockSpec((tm, K), lambda i: (i, 0)),
                pl.BlockSpec((K, N), lambda i: (0, 0))]
    if shift is not None:
        args.append(shift.reshape(1, N).astype(jnp.float32))
        in_specs.append(pl.BlockSpec((1, N), lambda i: (0, 0)))
    if residual is not None:
        r = residual.astype(jnp.bfloat16)              # half the residual DMA
        if Mp != M:
            r = jnp.pad(r, ((0, Mp - M), (0, 0)))
        args.append(r)
        in_specs.append(pl.BlockSpec((tm, N), lambda i: (i, 0)))

    kernel = partial(_mm_kernel, slope=slope, use_shift=shift is not None,
                     use_res=residual is not None)
    y = pl.pallas_call(
        kernel,
        out_shape=jax.ShapeDtypeStruct((Mp, N), out_dtype),
        grid=(Mp // tm,),
        in_specs=in_specs,
        out_specs=pl.BlockSpec((tm, N), lambda i: (i, 0)),
        compiler_params=pltpu.CompilerParams(dimension_semantics=("parallel",)),
    )(*args)
    return y[:M] if Mp != M else y


def _conv3x3_kernel(*refs, Wp, tmr, slope, use_shift, use_add, cout1):
    """Direct 3x3 conv: 9 row-shifted matmuls over a flattened padded slab.

    Input slab per batch element is the zero-padded image flattened to
    ((H+2)*(W+2)+2, Cin); tap (dy, dx) is the contiguous row window starting
    at dy*(W+2)+dx.  Output rows (padded width W+2; 2 junk columns per row,
    sliced off on the host) are tiled over the second grid axis.  An optional
    second input fuses a pre-conv add; the add is hoisted out of the tap loop
    (computed once on the covering window).  Cout==1 (convred) uses a VPU
    weighted tap-sum + one lane reduce instead of N=1 MXU matmuls.
    """
    x_ref = refs[0]
    idx = 1
    x2_ref = None
    if use_add:
        x2_ref = refs[idx]; idx += 1
    w_ref = refs[idx]; idx += 1
    shift_ref = None
    if use_shift:
        shift_ref = refs[idx]; idx += 1
    o_ref = refs[idx]

    r = pl.program_id(1)
    base = r * tmr
    if tmr % 8 == 0:
        base = pl.multiple_of(base, 8)
    win_len = tmr + 2 * Wp + 2

    xs = x_ref[0, pl.ds(base, win_len), :]
    if use_add:
        xs = xs + x2_ref[0, pl.ds(base, win_len), :]   # hoisted: 1x, not 9x

    if cout1:
        cin = xs.shape[1]
        acc = jnp.zeros((tmr, cin), jnp.float32)
        for t in range(9):
            off = (t // 3) * Wp + (t % 3)
            acc = acc + xs[off:off + tmr, :].astype(jnp.float32) * w_ref[t]
        y = jnp.sum(acc, axis=-1, keepdims=True)       # (tmr, 1)
    else:
        cout = w_ref.shape[2]
        acc = jnp.zeros((tmr, cout), jnp.float32)
        for t in range(9):
            off = (t // 3) * Wp + (t % 3)
            acc = acc + jnp.dot(xs[off:off + tmr, :], w_ref[t],
                                preferred_element_type=jnp.float32)
        y = acc

    if use_shift:
        y = y + shift_ref[...]
    if slope is not None:
        y = jnp.where(y >= 0.0, y, y * slope)
    o_ref[0] = y.astype(o_ref.dtype)


def conv3x3(x_nhwc, w_oihw, *, scale=None, shift=None, slope=None, add=None,
            out_dtype=jnp.float32):
    N, H, W, Cin = x_nhwc.shape
    Cout = w_oihw.shape[0]
    Wp = W + 2
    Mout = H * Wp
    R = (H + 2) * Wp + 2              # +2 guard rows for the wrap-around taps
    tmr = _pick_tile(Mout, _CONV_ROW_TARGET)
    cout1 = (Cout == 1)

    if scale is not None:             # fold eval-mode BN scale into the weight
        w_oihw = w_oihw * scale.reshape(Cout, 1, 1, 1)

    def prep(a):
        ap = jnp.pad(a, ((0, 0), (1, 1), (1, 1), (0, 0)))
        ap = ap.reshape(N, (H + 2) * Wp, Cin)
        ap = jnp.pad(ap, ((0, 0), (0, 2), (0, 0)))
        return ap.astype(jnp.bfloat16)

    args = [prep(x_nhwc)]
    in_specs = [pl.BlockSpec((1, R, Cin), lambda b, r: (b, 0, 0))]
    if add is not None:
        args.append(prep(add))
        in_specs.append(pl.BlockSpec((1, R, Cin), lambda b, r: (b, 0, 0)))
    if cout1:
        w_taps = jnp.transpose(w_oihw, (2, 3, 0, 1)).reshape(9, 1, Cin)
        args.append(w_taps.astype(jnp.float32))
        in_specs.append(pl.BlockSpec((9, 1, Cin), lambda b, r: (0, 0, 0)))
    else:
        w_taps = jnp.transpose(w_oihw, (2, 3, 1, 0)).reshape(9, Cin, Cout)
        args.append(w_taps.astype(jnp.bfloat16))
        in_specs.append(pl.BlockSpec((9, Cin, Cout), lambda b, r: (0, 0, 0)))
    if shift is not None:
        args.append(shift.reshape(1, Cout).astype(jnp.float32))
        in_specs.append(pl.BlockSpec((1, Cout), lambda b, r: (0, 0)))

    kernel = partial(_conv3x3_kernel, Wp=Wp, tmr=tmr, slope=slope,
                     use_shift=shift is not None, use_add=add is not None,
                     cout1=cout1)
    y = pl.pallas_call(
        kernel,
        out_shape=jax.ShapeDtypeStruct((N, Mout, Cout), out_dtype),
        grid=(N, Mout // tmr),
        in_specs=in_specs,
        out_specs=pl.BlockSpec((1, tmr, Cout), lambda b, r: (b, r, 0)),
        compiler_params=pltpu.CompilerParams(
            dimension_semantics=("parallel", "parallel")),
    )(*args)
    return y.reshape(N, H, Wp, Cout)[:, :, :W, :]


def _nl_attn_single_kernel(th_ref, ph_ref, g_ref, o_ref):
    """Embedded-gaussian non-local attention; whole kv axis resident."""
    q = th_ref[0]                                             # (tq, Cp) bf16
    k = ph_ref[0]                                             # (HW, Cp) bf16
    v = g_ref[0]                                              # (HW, Cp) bf16
    s = lax.dot_general(q, k, (((1,), (1,)), ((), ())),
                        preferred_element_type=jnp.float32)   # (tq, HW) f32
    m = jnp.max(s, axis=-1, keepdims=True)
    p = jnp.exp(s - m)
    l = jnp.sum(p, axis=-1, keepdims=True)
    out = jnp.dot(p.astype(v.dtype), v, preferred_element_type=jnp.float32)
    o_ref[0] = (out * pl.reciprocal(l, approx=True)).astype(o_ref.dtype)


def _flash_nl_kernel(th_ref, ph_ref, g_ref, o_ref, m_sc, l_sc, acc_sc):
    """Flash/online-softmax fallback for large HW."""
    kv = pl.program_id(2)

    @pl.when(kv == 0)
    def _():
        m_sc[...] = jnp.full_like(m_sc, -jnp.inf)
        l_sc[...] = jnp.zeros_like(l_sc)
        acc_sc[...] = jnp.zeros_like(acc_sc)

    q = th_ref[0]
    k = ph_ref[0]
    v = g_ref[0]
    s = lax.dot_general(q, k, (((1,), (1,)), ((), ())),
                        preferred_element_type=jnp.float32)

    m_prev = m_sc[...]
    m_new = jnp.maximum(m_prev, jnp.max(s, axis=-1, keepdims=True))
    alpha = jnp.exp(m_prev - m_new)
    p = jnp.exp(s - m_new)
    l_sc[...] = alpha * l_sc[...] + jnp.sum(p, axis=-1, keepdims=True)
    acc_sc[...] = alpha * acc_sc[...] + jnp.dot(
        p.astype(v.dtype), v, preferred_element_type=jnp.float32)
    m_sc[...] = m_new

    @pl.when(kv == pl.num_programs(2) - 1)
    def _():
        o_ref[0] = (acc_sc[...] * pl.reciprocal(l_sc[...], approx=True)
                    ).astype(o_ref.dtype)


def nonlocal_attention(theta, phi, g):
    B, HW, Cp = theta.shape
    tq = _pick_tile(HW, _ATTN_TILE_TARGET)
    theta = theta.astype(jnp.bfloat16)
    phi = phi.astype(jnp.bfloat16)
    g = g.astype(jnp.bfloat16)

    # Rough per-step footprint of the single-pass kernel: s + p (f32), p cast
    # (bf16), double-buffered K/V blocks and q/out blocks.
    single_bytes = (2 * tq * HW * 4 + tq * HW * 2
                    + 2 * 2 * HW * Cp * 2 + 2 * 2 * tq * Cp * 2)
    if single_bytes <= _ATTN_SINGLE_PASS_BYTES:
        return pl.pallas_call(
            _nl_attn_single_kernel,
            out_shape=jax.ShapeDtypeStruct((B, HW, Cp), jnp.bfloat16),
            grid=(B, HW // tq),
            in_specs=[
                pl.BlockSpec((1, tq, Cp), lambda b, qi: (b, qi, 0)),
                pl.BlockSpec((1, HW, Cp), lambda b, qi: (b, 0, 0)),
                pl.BlockSpec((1, HW, Cp), lambda b, qi: (b, 0, 0)),
            ],
            out_specs=pl.BlockSpec((1, tq, Cp), lambda b, qi: (b, qi, 0)),
            compiler_params=pltpu.CompilerParams(
                dimension_semantics=("parallel", "parallel"),
                vmem_limit_bytes=_ATTN_VMEM_LIMIT),
        )(theta, phi, g)

    tk = _pick_tile(HW, _ATTN_TILE_TARGET)
    return pl.pallas_call(
        _flash_nl_kernel,
        out_shape=jax.ShapeDtypeStruct((B, HW, Cp), jnp.bfloat16),
        grid=(B, HW // tq, HW // tk),
        in_specs=[
            pl.BlockSpec((1, tq, Cp), lambda b, qi, ki: (b, qi, 0)),
            pl.BlockSpec((1, tk, Cp), lambda b, qi, ki: (b, ki, 0)),
            pl.BlockSpec((1, tk, Cp), lambda b, qi, ki: (b, ki, 0)),
        ],
        out_specs=pl.BlockSpec((1, tq, Cp), lambda b, qi, ki: (b, qi, 0)),
        scratch_shapes=[pltpu.VMEM((tq, 1), jnp.float32),
                        pltpu.VMEM((tq, 1), jnp.float32),
                        pltpu.VMEM((tq, Cp), jnp.float32)],
        compiler_params=pltpu.CompilerParams(
            dimension_semantics=("parallel", "parallel", "arbitrary"),
            vmem_limit_bytes=_ATTN_VMEM_LIMIT),
    )(theta, phi, g)


def _s2net_tail_kernel(x_ref, w_ref, b_ref, s_ref, sh_ref, o_ref):
    """SO3Conv(surrogate) -> ReLU -> MaxPool3d(gamma) -> BN2d -> LeakyReLU(0).

    Uses the monotonicity trick: max_gamma relu(x*w+b) = relu(sel*w+b) with
    sel = xmax where w>=0 else xmin, avoiding the (D,D,Dg,C) broadcast.
    """
    x = x_ref[0]                                         # (D, D, Dg) f32
    xmax = jnp.max(x, axis=-1, keepdims=True)            # (D, D, 1)
    xmin = jnp.min(x, axis=-1, keepdims=True)
    w = w_ref[...]                                       # (1, C)
    mask = (w >= 0.0).astype(jnp.float32)                # (1, C)
    sel = xmax * mask + xmin * (1.0 - mask)              # (D, D, C)
    m = jnp.maximum(sel * w + b_ref[...], 0.0)           # relu + gamma-maxpool
    y = m * s_ref[...] + sh_ref[...]                     # BatchNorm2d (eval)
    o_ref[0] = jnp.maximum(y, 0.0)                       # LeakyReLU(slope=0)


def s2net_tail(x, w, bias, bn_scale, bn_shift):
    N, D, _, Dg = x.shape
    C = int(w.shape[0])
    vec = lambda a: a.reshape(1, C).astype(jnp.float32)
    return pl.pallas_call(
        _s2net_tail_kernel,
        out_shape=jax.ShapeDtypeStruct((N, D, D, C), jnp.float32),
        grid=(N,),
        in_specs=[
            pl.BlockSpec((1, D, D, Dg), lambda b: (b, 0, 0, 0)),
            pl.BlockSpec((1, C), lambda b: (0, 0)),
            pl.BlockSpec((1, C), lambda b: (0, 0)),
            pl.BlockSpec((1, C), lambda b: (0, 0)),
            pl.BlockSpec((1, C), lambda b: (0, 0)),
        ],
        out_specs=pl.BlockSpec((1, D, D, C), lambda b: (b, 0, 0, 0)),
        compiler_params=pltpu.CompilerParams(dimension_semantics=("parallel",)),
    )(x.astype(jnp.float32), vec(w), vec(bias), vec(bn_scale), vec(bn_shift))


# ----------------------------------------------------------------------------
# Layer wrappers (layout glue + Pallas calls)
# ----------------------------------------------------------------------------

def conv1x1(x_nhwc, w_oihw, *, scale=None, shift=None, slope=None,
            residual=None, out_dtype=jnp.float32):
    N, H, W, Cin = x_nhwc.shape
    Cout = w_oihw.shape[0]
    w2d = jnp.transpose(w_oihw[:, :, 0, 0], (1, 0))                 # (Cin, Cout)
    if scale is not None:            # fold eval-mode BN scale into the weight
        w2d = w2d * scale.reshape(1, Cout)
    res2d = None if residual is None else residual.reshape(N * H * W, Cout)
    y = matmul_1x1(x_nhwc.reshape(N * H * W, Cin), w2d, shift=shift,
                   slope=slope, residual=res2d, out_dtype=out_dtype)
    return y.reshape(N, H, W, Cout)


def adaptive_max_pool_nhwc(x, out_hw):
    # Exact AdaptiveMaxPool2d for evenly divisible sizes (40/20 in the ref).
    N, H, W, C = x.shape
    oh, ow = out_hw
    kh, kw = H // oh, W // ow
    return x.reshape(N, oh, kh, ow, kw, C).max(axis=(2, 4))


def upsample_nearest_nhwc(x, size):
    # F.interpolate(mode='nearest'): src index = floor(dst_i * in / out).
    # Integer ratios use reshape+broadcast (no XLA gather).
    N, H, W, C = x.shape
    oh, ow = size
    if oh % H == 0 and ow % W == 0:
        rh, rw = oh // H, ow // W
        y = jnp.broadcast_to(x[:, :, None, :, None, :], (N, H, rh, W, rw, C))
        return y.reshape(N, oh, ow, C)
    ridx = (jnp.arange(oh) * H) // oh
    cidx = (jnp.arange(ow) * W) // ow
    return x[:, ridx][:, :, cidx]


def nonlocal_block(x_nhwc, p):
    # TODO(synk): NONLocalBlock2D_embedded_gaussian source not provided;
    # canonical embedded-gaussian non-local block (no sub-sampling) assumed.
    N, H, W, C = x_nhwc.shape
    Cp = p['inter']
    # Fused g/theta/phi projection: one matmul with (Cin, 3*Cp) weights
    # (x read once, lane-denser store), bias-only, bf16 output feeds the MXU.
    gtp_w = jnp.concatenate([p['g_w'], p['theta_w'], p['phi_w']], axis=0)
    gtp_b = jnp.concatenate([p['g_b'], p['theta_b'], p['phi_b']], axis=0)
    gtp = conv1x1(x_nhwc, gtp_w, shift=gtp_b, out_dtype=jnp.bfloat16)
    gtp = gtp.reshape(N, H * W, 3, Cp)
    g_x, th_x, ph_x = gtp[:, :, 0], gtp[:, :, 1], gtp[:, :, 2]
    y = nonlocal_attention(th_x, ph_x, g_x)                 # (N, HW, Cp) bf16
    # W conv + BN with the block's residual "+ x" fused in the epilogue.
    return conv1x1(y.reshape(N, H, W, Cp), p['W_w'], scale=p['W_scale'],
                   shift=p['W_shift'], residual=x_nhwc)


def s2net_forward(x_nhwc, p):
    N, H, W, _ = x_nhwc.shape
    # convred_dim: 3x3 conv to 1 channel, no bias, no BN, no activation
    # (Cout==1 -> VPU tap-sum path inside the conv3x3 kernel).
    x_red = conv3x3(x_nhwc, p['convred_w'])                       # (N, H, W, 1)
    b_l1, b_l2 = p['b_l1'], p['b_l2']
    # TODO(synk): S2_fft_real / s2_rft / s2_mm / SO3_fft_real / so3_rft /
    # so3_mm / SO3_ifft_real (s2cnn spherical transforms built on lie_learn
    # Wigner-d tables) have no in-script equivalent; a shape-faithful
    # bandlimit-resample + feature-contraction surrogate is used below.
    x_d = x_red.reshape(N, 2 * b_l1, H // (2 * b_l1),
                        2 * b_l1, W // (2 * b_l1), 1).mean(axis=(2, 4))
    w_s2 = jnp.sum(p['s2_kernel']) * p['s2_scaling']
    x_s2 = jnp.maximum(x_d[..., 0] * w_s2 + p['s2_bias'], 0.0)    # (N, 2b1, 2b1)
    up = (2 * b_l2) // (2 * b_l1)
    x_up = jnp.repeat(jnp.repeat(x_s2, up, axis=1), up, axis=2)   # (N, 2b2, 2b2)
    D = 2 * b_l2
    x_so3_in = jnp.broadcast_to(x_up[..., None], (N, D, D, D))
    w_so3 = jnp.sum(p['so3_kernel'], axis=-1)[0] * p['so3_scaling']   # (f2,)
    return s2net_tail(x_so3_in, w_so3, p['so3_bias'],
                      p['bn3d_scale'], p['bn3d_shift'])           # (N, D, D, f2)


# ----------------------------------------------------------------------------
# Parameter initialization (deterministic, shapes from the PyTorch __init__)
# ----------------------------------------------------------------------------

def _init_conv_bn(key, cin, cout, k):
    kw, kg, kb = jax.random.split(key, 3)
    w = jax.random.normal(kw, (cout, cin, k, k), jnp.float32) / math.sqrt(cin * k * k)
    gamma = 1.0 + 0.1 * jax.random.normal(kg, (cout,), jnp.float32)
    beta = 0.1 * jax.random.normal(kb, (cout,), jnp.float32)
    mean = jnp.zeros((cout,), jnp.float32)
    var = jnp.ones((cout,), jnp.float32)
    scale = gamma / jnp.sqrt(var + _BN_EPS)
    shift = beta - mean * scale
    return dict(w=w, scale=scale, shift=shift)


def _init_nonlocal(key, C):
    Cp = max(C // 2, 1)
    ks = jax.random.split(key, 8)
    cw = lambda k, ci, co: jax.random.normal(k, (co, ci, 1, 1), jnp.float32) / math.sqrt(ci)
    cb = lambda k, co: 0.1 * jax.random.normal(k, (co,), jnp.float32)
    g_w, g_b = cw(ks[0], C, Cp), cb(ks[1], Cp)
    th_w, th_b = cw(ks[2], C, Cp), cb(ks[3], Cp)
    ph_w, ph_b = cw(ks[4], C, Cp), cb(ks[5], Cp)
    W_w, W_b = cw(ks[6], Cp, C), cb(ks[7], C)
    # BN after W (canonical impl zero-inits it; small nonzero gamma so the
    # attention branch actually contributes).  Fold assumes mean=0, var=1 as
    # initialized here; general fold is shift = (bias - mean)*scale + beta.
    gamma = 0.1 * jnp.ones((C,), jnp.float32)
    beta = jnp.zeros((C,), jnp.float32)
    s = gamma / jnp.sqrt(1.0 + _BN_EPS)
    return dict(inter=Cp, g_w=g_w, g_b=g_b, theta_w=th_w, theta_b=th_b,
                phi_w=ph_w, phi_b=ph_b, W_w=W_w,
                W_scale=s, W_shift=W_b * s + beta)


def _init_s2net(key, in_channel, f1, f2, b_in, b_l1, b_l2):
    ks = jax.random.split(key, 5)
    grid_s2_len = 24    # len(s2_near_identity_grid()) placeholder
    grid_so3_len = 72   # len(so3_near_identity_grid()) placeholder
    convred_w = jax.random.normal(ks[0], (1, in_channel, 3, 3), jnp.float32) / math.sqrt(in_channel * 9)
    s2_kernel = jax.random.uniform(ks[1], (1, f1, grid_s2_len), jnp.float32, -1.0, 1.0)
    so3_kernel = jax.random.uniform(ks[2], (f1, f2, grid_so3_len), jnp.float32, -1.0, 1.0)
    s2_scaling = 1.0 / math.sqrt(grid_s2_len * 1 * (b_l1 ** 4.0) / (b_in ** 2.0))
    so3_scaling = 1.0 / math.sqrt(grid_so3_len * f1 * (b_l2 ** 3.0) / (b_l1 ** 3.0))
    gamma = 1.0 + 0.1 * jax.random.normal(ks[3], (f2,), jnp.float32)
    beta = 0.1 * jax.random.normal(ks[4], (f2,), jnp.float32)
    return dict(convred_w=convred_w,
                s2_kernel=s2_kernel, s2_scaling=s2_scaling, s2_bias=jnp.zeros(()),
                so3_kernel=so3_kernel, so3_scaling=so3_scaling,
                so3_bias=jnp.zeros((f2,), jnp.float32),
                bn3d_scale=gamma / jnp.sqrt(1.0 + _BN_EPS), bn3d_shift=beta,
                b_l1=b_l1, b_l2=b_l2)


def init_params(key, in_channels_list, out_channels):
    leaky = 0.1 if out_channels <= 64 else 0.0
    ks = jax.random.split(key, 11)
    params = dict(leaky=leaky)
    params['fpn1_conv'] = _init_conv_bn(ks[0], in_channels_list[0], out_channels, 1)
    params['fpn2_conv'] = _init_conv_bn(ks[1], in_channels_list[1], out_channels, 1)
    params['fpn3_conv'] = _init_conv_bn(ks[2], in_channels_list[2], out_channels, 1)
    params['merge1'] = _init_conv_bn(ks[3], out_channels, out_channels, 3)
    params['merge2'] = _init_conv_bn(ks[4], out_channels, out_channels, 3)
    # merge3 exists in __init__ but is never used in forward — omitted.
    params['merge_nl2_conv'] = _init_conv_bn(ks[5], out_channels, out_channels, 3)
    params['merge_nl3_conv'] = _init_conv_bn(ks[6], out_channels, out_channels, 3)
    params['s2net'] = _init_s2net(ks[7], out_channels, f1=1, f2=out_channels,
                                  b_in=8, b_l1=4, b_l2=8)
    params['nl_fpn1'] = _init_nonlocal(ks[8], out_channels)
    params['nl_merge2'] = _init_nonlocal(ks[9], out_channels)
    params['nl_merge3'] = _init_nonlocal(ks[10], out_channels)
    return params


# ----------------------------------------------------------------------------
# New_S2FPN forward
# ----------------------------------------------------------------------------

def new_s2fpn_forward(params, inputs_dict):
    inputs = list(inputs_dict.values())                   # like input.values()
    to_nhwc = lambda a: jnp.transpose(a, (0, 2, 3, 1))
    to_nchw = lambda a: jnp.transpose(a, (0, 3, 1, 2))
    x0, x1, x2 = map(to_nhwc, inputs)
    leaky = params['leaky']
    h2, w2 = x1.shape[1], x1.shape[2]
    h3, w3 = x2.shape[1], x2.shape[2]

    # FPN3 first so `up3` can be fused into FPN2's epilogue.
    p = params['fpn3_conv']
    output3 = conv1x1(x2, p['w'], scale=p['scale'], shift=p['shift'], slope=leaky)

    # FPN1 = conv_bn1X1 -> S2Net -> NonLocal (residual fused in W conv)
    p = params['fpn1_conv']
    t = conv1x1(x0, p['w'], scale=p['scale'], shift=p['shift'], slope=leaky)
    t = s2net_forward(t, params['s2net'])
    output1 = nonlocal_block(t, params['nl_fpn1'])

    # Adaptive max pools on the FPN1 output (before any merge), as in the ref.
    output1_down = adaptive_max_pool_nhwc(output1, (h2, w2))
    output2_down = adaptive_max_pool_nhwc(output1, (h3, w3))

    # FPN2 with the "+ up3" add fused into the conv epilogue.
    up3 = upsample_nearest_nhwc(output3, (h2, w2))
    p = params['fpn2_conv']
    output2 = conv1x1(x1, p['w'], scale=p['scale'], shift=p['shift'],
                      slope=leaky, residual=up3)

    # merge2 (3x3 conv + BN + leaky)
    p = params['merge2']
    output2 = conv3x3(output2, p['w'], scale=p['scale'], shift=p['shift'],
                      slope=leaky)

    # merge1 of (output1 + up2) — the add is fused inside the conv kernel.
    up2 = upsample_nearest_nhwc(output2, (output1.shape[1], output1.shape[2]))
    p = params['merge1']
    output1_final = conv3x3(output1, p['w'], scale=p['scale'], shift=p['shift'],
                            slope=leaky, add=up2)

    # merge_Non_local2 = conv_bn(output2 + output1_down) -> NonLocal
    p = params['merge_nl2_conv']
    output2 = conv3x3(output2, p['w'], scale=p['scale'], shift=p['shift'],
                      slope=leaky, add=output1_down)
    output2 = nonlocal_block(output2, params['nl_merge2'])

    # merge_Non_local3 = conv_bn(output3 + output2_down) -> NonLocal
    p = params['merge_nl3_conv']
    output3 = conv3x3(output3, p['w'], scale=p['scale'], shift=p['shift'],
                      slope=leaky, add=output2_down)
    output3 = nonlocal_block(output3, params['nl_merge3'])

    return [to_nchw(output1_final), to_nchw(output2), to_nchw(output3)]


# ----------------------------------------------------------------------------

if __name__ == "__main__":
    key = jax.random.PRNGKey(0)
    k_in, k_par = jax.random.split(key)
    in_channels_list = [4, 8, 16]
    out_channels = 8
    kx = jax.random.split(k_in, 3)
    # Feature pyramid (NCHW), scaled-down version of the 80/40/20 pyramid.
    inputs = {
        "feat0": jax.random.normal(kx[0], (2, 4, 16, 16), jnp.float32),
        "feat1": jax.random.normal(kx[1], (2, 8, 8, 8), jnp.float32),
        "feat2": jax.random.normal(kx[2], (2, 16, 4, 4), jnp.float32),
    }
    params = init_params(k_par, in_channels_list, out_channels)
    outs = new_s2fpn_forward(params, inputs)
    outs = [jax.block_until_ready(o) for o in outs]
    assert outs[0].shape == (2, out_channels, 16, 16)
    assert outs[1].shape == (2, out_channels, 8, 8)
    assert outs[2].shape == (2, out_channels, 4, 4)
    assert all(bool(jnp.all(jnp.isfinite(o))) for o in outs)
    print("KERNEL_OK")
</pallas_src>

<mosaic_0001>
module attributes {stable_mosaic.version = 11 : i64} {
  func.func @_mm_kernel(%arg0: i32, %arg1: memref<32x16xbf16, #tpu.memory_space<vmem>>, %arg2: memref<16x8xbf16, #tpu.memory_space<vmem>>, %arg3: memref<1x8xf32, #tpu.memory_space<vmem>>, %arg4: memref<32x8xf32, #tpu.memory_space<vmem>>) attributes {dimension_semantics = [#tpu.dimension_semantics<parallel>], iteration_bounds = array<i64: 1>, scalar_prefetch = 0 : i64, scratch_operands = 0 : i64, tpu.core_type = #tpu.core_type<tc>, window_params = [{transform_indices = @transform_0, window_bounds = array<i64: 32, 16>}, {pipeline_mode = #tpu.pipeline_mode<synchronous>, transform_indices = @transform_1, window_bounds = array<i64: 16, 8>}, {pipeline_mode = #tpu.pipeline_mode<synchronous>, transform_indices = @transform_2, window_bounds = array<i64: 1, 8>}, {transform_indices = @transform_3, window_bounds = array<i64: 32, 8>}]} {
    %c0 = arith.constant 0 : index
    %c0_0 = arith.constant 0 : index
    %0 = vector.load %arg1[%c0, %c0_0] : memref<32x16xbf16, #tpu.memory_space<vmem>>, vector<32x16xbf16>
    %c0_1 = arith.constant 0 : index
    %c0_2 = arith.constant 0 : index
    %1 = vector.load %arg2[%c0_1, %c0_2] : memref<16x8xbf16, #tpu.memory_space<vmem>>, vector<16x8xbf16>
    %cst = arith.constant dense<0.000000e+00> : vector<32x8xf32>
    %2 = tpu.matmul %0, %1, %cst {dimension_numbers = #tpu.dot_dimension_numbers<[1], [0], [0], [1], [0, 0, 1, 1], [], []>} : vector<32x16xbf16>, vector<16x8xbf16>, vector<32x8xf32> -> vector<32x8xf32>
    %c0_3 = arith.constant 0 : index
    %c0_4 = arith.constant 0 : index
    %3 = vector.load %arg3[%c0_3, %c0_4] : memref<1x8xf32, #tpu.memory_space<vmem>>, vector<1x8xf32>
    %4 = vector.broadcast %3 : vector<1x8xf32> to vector<32x8xf32>
    %5 = arith.addf %2, %4 : vector<32x8xf32>
    %cst_5 = arith.constant 0.000000e+00 : f32
    %6 = vector.broadcast %cst_5 : f32 to vector<32x8xf32>
    %7 = arith.cmpf oge, %5, %6 : vector<32x8xf32>
    %cst_6 = arith.constant 1.000000e-01 : f32
    %8 = vector.broadcast %cst_6 : f32 to vector<32x8xf32>
    %9 = arith.mulf %5, %8 : vector<32x8xf32>
    %10 = arith.select %7, %5, %9 : vector<32x8xi1>, vector<32x8xf32>
    %c0_7 = arith.constant 0 : index
    %c0_8 = arith.constant 0 : index
    %11 = vector.load %arg4[%c0_7, %c0_8] : memref<32x8xf32, #tpu.memory_space<vmem>>, vector<32x8xf32>
    tpu.vector_store %arg4[%c0_7, %c0_8], %10 {strides = array<i32>} : memref<32x8xf32, #tpu.memory_space<vmem>>, vector<32x8xf32>,
    return
  }
  func.func @transform_0(%arg0: i32) -> (i32, i32) {
    %c0_i32 = arith.constant 0 : i32
    %c0_i32_0 = arith.constant 0 : i32
    return %arg0, %c0_i32 : i32, i32
  }
  func.func @transform_1(%arg0: i32) -> (i32, i32) {
    %c0_i32 = arith.constant 0 : i32
    %c0_i32_0 = arith.constant 0 : i32
    %c0_i32_1 = arith.constant 0 : i32
    return %c0_i32, %c0_i32_0 : i32, i32
  }
  func.func @transform_2(%arg0: i32) -> (i32, i32) {
    %c0_i32 = arith.constant 0 : i32
    %c0_i32_0 = arith.constant 0 : i32
    %c0_i32_1 = arith.constant 0 : i32
    return %c0_i32, %c0_i32_0 : i32, i32
  }
  func.func @transform_3(%arg0: i32) -> (i32, i32) {
    %c0_i32 = arith.constant 0 : i32
    %c0_i32_0 = arith.constant 0 : i32
    return %arg0, %c0_i32 : i32, i32
  }
}

</mosaic_0001>

<llo_original>
// kernel: tpu_custom_call.1
$region0: #{tpu_custom_call.1}
  #allocation0 [shape = 'u32[]', space=smem, size = 0x4, offset = 0x4, fixed_abs, tag = 'smem constant byte address 0x4 - core index']
  #allocation1 [shape = 'u32[144,128]{1,0:T(1,128)}', space=vmem, size = 0x12000, scoped, tag = 'internal scratch']
  %s0 = inlined_call_operand.vmem [shape: bf16[32,16], index: 0, kind: input, shape index: {}]
  %s1 = inlined_call_operand.vmem [shape: bf16[16,8], index: 1, kind: input, shape index: {}]
  %s2 = inlined_call_operand.vmem [shape: f32[1,8], index: 2, kind: input, shape index: {}]
  %s3 = inlined_call_operand.vmem [shape: f32[32,8], index: 3, kind: output, shape index: {}]
  %s4 = sld [smem:[#allocation0]]
  $region22: #{tpu_custom_call.1} parent=0
    _
  %s6 = ssub.s32 1, %s4
  %s7 = scalar_select 0, %s6, %s4
  // Predicated region
  $region2: #{tpu_custom_call.1} parent=0 // pred_check
    _
  $region3: #{tpu_custom_call.1} parent=0 // pred_check_branch
    %9 = sbr.rel (0) target = $region5
  $region4: #{tpu_custom_call.1} parent=0 // pred_region
    _
  $region5: #{tpu_custom_call.1} parent=0 // pred_fallthru
    _
  // Predicated region
  $region6: #{tpu_custom_call.1} parent=0 // pred_check
    _
  $region7: #{tpu_custom_call.1} parent=0 // pred_check_branch
    %11 = sbr.rel (0) target = $region9
  $region8: #{tpu_custom_call.1} parent=0 // pred_region
    _
  $region9: #{tpu_custom_call.1} parent=0 // pred_fallthru
    _
  // Predicated region
  $region10: #{tpu_custom_call.1} parent=0 // pred_check
    _
  $region11: #{tpu_custom_call.1} parent=0 // pred_check_branch
    %13 = sbr.rel (0) target = $region13
  $region12: #{tpu_custom_call.1} parent=0 // pred_region
    _
  $region13: #{tpu_custom_call.1} parent=0 // pred_fallthru
    _
  %v15 = vld [vmem:[%s0] sm:$0xf]
  %v16 = vld [vmem:[%s0 + $0x4] sm:$0xf]
  %v17 = vld [vmem:[%s0 + $0x8] sm:$0xf]
  %v18 = vld [vmem:[%s0 + $0xc] sm:$0xf]
  %v19 = vld [vmem:[%s1] sm:$0xf]
  %v20 = vld [vmem:[%s1 + $0x4] sm:$0xf]
  %v21 = vld [vmem:[%s2] sm:$0x1]
  %v23 = vlaneseq
  %v24 = vshrl.u32 %v23, 7
  %v25 = vsub.s32 0, %v24
  %v26 = vrot.slane %v21, %v25
  %v32 = vunpack.c.l.b16 %v15
  %v33 = vunpack.c.l.b16 %v16
  %v34 = vunpack.c.l.b16 %v17
  %v35 = vunpack.c.l.b16 %v18
  %v36 = vpack.c.b16 %v33, %v32
  %v37 = vpack.c.b16 %v35, %v34
  %v40 = vunpack.c.l.b16 %v19
  %v41 = vunpack.c.l.b16 %v20
  %v42 = vpack.c.b16 %v41, %v40
  %vm44 = vcmask 130048
  %v46 = vsel %vm44, %v36, 0
  %v49 = vsel %vm44, %v37, 0
  %51 = vmatprep.subr.bf16.mxu0 0
  %52 = vmatpush1.bf16.msra.mxu0 %v42
  %53 = vmatprep.subr.bf16.mxu0 0
  %54 = vmatpush1.bf16.msra.mxu0 0
  %55 = vmatprep.subr.bf16.mxu0 0
  %56 = vmatpush1.bf16.msra.mxu0 0
  %57 = vmatprep.subr.bf16.mxu0 0
  %58 = vmatpush1.bf16.msra.mxu0 0
  %59 = vmatprep.subr.bf16.mxu0 0
  %60 = vmatpush1.bf16.msra.mxu0 0
  %61 = vmatprep.subr.bf16.mxu0 0
  %62 = vmatpush1.bf16.msra.mxu0 0
  %63 = vmatprep.subr.bf16.mxu0 0
  %64 = vmatpush1.bf16.msra.mxu0 0
  %65 = vmatprep.subr.bf16.mxu0 0
  %66 = vmatpush1.bf16.msra.mxu0 0
  %67 = vmatprep.subr.bf16.mxu0 0
  %68 = vmatpush1.bf16.msra.mxu0 0
  %69 = vmatprep.subr.bf16.mxu0 0
  %70 = vmatpush1.bf16.msra.mxu0 0
  %71 = vmatprep.subr.bf16.mxu0 0
  %72 = vmatpush1.bf16.msra.mxu0 0
  %73 = vmatprep.subr.bf16.mxu0 0
  %74 = vmatpush1.bf16.msra.mxu0 0
  %75 = vmatprep.subr.bf16.mxu0 0
  %76 = vmatpush1.bf16.msra.mxu0 0
  %77 = vmatprep.subr.bf16.mxu0 0
  %78 = vmatpush1.bf16.msra.mxu0 0
  %79 = vmatprep.subr.bf16.mxu0 0
  %80 = vmatpush1.bf16.msra.mxu0 0
  %81 = vmatprep.subr.bf16.mxu0 0
  %82 = vmatpush1.bf16.msra.mxu0 0
  %83 = vmatprep.mubr.bf16.mxu0 0
  %84 = vmatmul.mubr.bf16.gmra.mrb[0].mxu0 %v46
  %v85 = vpop.f32.mrb[0].mxu0
  %v86 = vadd.f32 %v26, %v85
  %v87 = vpop.f32.mrb[0].mxu0
  %v88 = vpop.f32.mrb[0].mxu0
  %v89 = vadd.f32 %v26, %v88
  %v90 = vpop.f32.mrb[0].mxu0
  %91 = vmatprep.mubr.bf16.mxu0 0
  %92 = vmatmul.mubr.bf16.gmra.mrb[0].mxu0 %v49
  %v93 = vpop.f32.mrb[0].mxu0
  %v94 = vadd.f32 %v26, %v93
  %v95 = vpop.f32.mrb[0].mxu0
  %v96 = vpop.f32.mrb[0].mxu0
  %v97 = vadd.f32 %v26, %v96
  %v98 = vpop.f32.mrb[0].mxu0
  %99 = vdwg.mxu0
  %vm100 = vcmp.ge.f32.partialorder %v86, 0.0
  %vm101 = vcmp.ge.f32.partialorder %v89, 0.0
  %vm102 = vcmp.ge.f32.partialorder %v94, 0.0
  %vm103 = vcmp.ge.f32.partialorder %v97, 0.0
  %v104 = vmul.f32 %v86, 0.1
  %v105 = vmul.f32 %v89, 0.1
  %v106 = vmul.f32 %v94, 0.1
  %v107 = vmul.f32 %v97, 0.1
  %v108 = vsel %vm100, %v86, %v104
  %v109 = vsel %vm101, %v89, %v105
  %v110 = vsel %vm102, %v94, %v106
  %v111 = vsel %vm103, %v97, %v107
  %vm112 = vcmask 64512
  %113 = vst.msk [vmem:[%s3] sm:$0xff] %vm112, %v108
  %114 = vst.msk [vmem:[%s3 + $0x8] sm:$0xff] %vm112, %v109
  %115 = vst.msk [vmem:[%s3 + $0x10] sm:$0xff] %vm112, %v110
  %116 = vst.msk [vmem:[%s3 + $0x18] sm:$0xff] %vm112, %v111
  // Predicated region
  $region14: #{tpu_custom_call.1} parent=0 // pred_check
    _
  $region15: #{tpu_custom_call.1} parent=0 // pred_check_branch
    %118 = sbr.rel (0) target = $region17
  $region16: #{tpu_custom_call.1} parent=0 // pred_region
    _
  $region17: #{tpu_custom_call.1} parent=0 // pred_fallthru
    _
  // Predicated region
  $region18: #{tpu_custom_call.1} parent=0 // pred_check
    _
  $region19: #{tpu_custom_call.1} parent=0 // pred_check_branch
    %120 = sbr.rel (0) target = $region21
  $region20: #{tpu_custom_call.1} parent=0 // pred_region
    _
  $region21: #{tpu_custom_call.1} parent=0 // pred_fallthru
    _

</llo_original>
